<compile_context>
chip_gen: v7x
topology: tpu7x:2x2x1
jax: 0.10.0
libtpu: 0.0.40
codegen_flags: <defaults>
</compile_context>

<pallas_src>
import functools

import jax
import jax.numpy as jnp
from jax.experimental import pallas as pl
from jax.experimental.pallas import tpu as pltpu

MULTIPLIER = 3
BIAS = True


def _round_up(n, m):
    return ((n + m - 1) // m) * m


def _sigmoid_via_tanh(x):
    # sigmoid(x) = 0.5 * tanh(0.5 * x) + 0.5 : one EUP transcendental instead of exp + recip.
    return 0.5 * jnp.tanh(0.5 * x) + 0.5


def _gru_cell_kernel(x_ref, h_ref, w_rz_ref, wx_n_ref, wh_n_ref,
                     b_rz_ref, bx_n_ref, bh_n_ref, o_ref):
    """One GRU cell step for a (block_b, *) tile of the batch.

    x_ref:   (Bb, Kp)        activations in the MXU/weight dtype
    h_ref:   (Bb, Hp)
    w_rz:    (Kp+Hp, 2*Hp)   fused [Wx_r Wx_z ; Wh_r Wh_z]
    wx_n:    (Kp, Hp)        candidate-gate x-side weights
    wh_n:    (Hp, Hp)        candidate-gate h-side weights (kept separate: scaled by reset)
    b_rz:    (1, 2*Hp) f32   (bx_r+bh_r | bx_z+bh_z)
    bx_n/bh_n: (1, Hp) f32
    """
    Hp = o_ref.shape[-1]

    x = x_ref[...]
    h = h_ref[...]
    h_f32 = h.astype(jnp.float32)

    # Fused contraction for reset+update: [x | h] @ [Wx_rz ; Wh_rz]. Kp/Hp are multiples of
    # 128, so the concat boundary and the lane slices below are whole-vreg (free).
    xh = jnp.concatenate([x, h], axis=-1)                                    # (Bb, Kp+Hp)
    rz = jnp.dot(xh, w_rz_ref[...], preferred_element_type=jnp.float32) + b_rz_ref[...]

    reset_gate = _sigmoid_via_tanh(rz[:, :Hp])

    # Candidate gate: h_U[2] (including its bias) is multiplied by the reset gate, exactly
    # as in the PyTorch module, so it cannot be folded into the fused slab.
    hu_n = jnp.dot(h, wh_n_ref[...], preferred_element_type=jnp.float32) + bh_n_ref[...]
    xw_n = jnp.dot(x, wx_n_ref[...], preferred_element_type=jnp.float32) + bx_n_ref[...]
    current_mem = jnp.tanh(xw_n + reset_gate * hu_n)

    update_gate = _sigmoid_via_tanh(rz[:, Hp:])

    # finalMemory = updateGate * (currentMemoryContent - hidden) + hidden
    o_ref[...] = (update_gate * (current_mem - h_f32) + h_f32).astype(o_ref.dtype)


def prepare_gru_params(wx, wh, bx, bh, *, param_dtype=jnp.bfloat16):
    """Convert PyTorch-layout GRU weights into the kernel's fused, lane-padded layout.

    Call ONCE and cache the result (outside any sequence loop) — doing this per step would
    cost more HBM traffic than the cell kernel itself.

    wx: (K, 3H) transpose of linear_input.weight,  gate order [reset | update | new]
    wh: (H, 3H) transpose of linear_hidden.weight
    bx, bh: (1, 3H)
    """
    K, three_h = wx.shape
    H = wh.shape[0]
    assert three_h == MULTIPLIER * H
    Kp = _round_up(K, 128)
    Hp = _round_up(H, 128)

    wx = wx.astype(jnp.float32)
    wh = wh.astype(jnp.float32)
    bx = bx.reshape(1, three_h).astype(jnp.float32)
    bh = bh.reshape(1, three_h).astype(jnp.float32)

    def gate(w, g):
        return w[:, g * H:(g + 1) * H]

    def pad_to(a, rows, cols):
        return jnp.pad(a, ((0, rows - a.shape[0]), (0, cols - a.shape[1])))

    # Fused [x | h] slab for the reset and update gates: (Kp + Hp, 2*Hp).
    top = jnp.concatenate([pad_to(gate(wx, 0), Kp, Hp), pad_to(gate(wx, 1), Kp, Hp)], axis=1)
    bot = jnp.concatenate([pad_to(gate(wh, 0), Hp, Hp), pad_to(gate(wh, 1), Hp, Hp)], axis=1)
    w_rz = jnp.concatenate([top, bot], axis=0).astype(param_dtype)
    b_rz = jnp.concatenate([pad_to(gate(bx, 0) + gate(bh, 0), 1, Hp),
                            pad_to(gate(bx, 1) + gate(bh, 1), 1, Hp)], axis=1)

    # Candidate ("new") gate kept split.
    wx_n = pad_to(gate(wx, 2), Kp, Hp).astype(param_dtype)
    wh_n = pad_to(gate(wh, 2), Hp, Hp).astype(param_dtype)
    bx_n = pad_to(gate(bx, 2), 1, Hp)
    bh_n = pad_to(gate(bh, 2), 1, Hp)

    # TODO(synk): optional fp8 (v7x) / int8 (v5e/v6e) weight quantization with per-gate scales.
    return dict(w_rz=w_rz, wx_n=wx_n, wh_n=wh_n, b_rz=b_rz, bx_n=bx_n, bh_n=bh_n)


def _pick_block_b(B):
    """Prefer MXU-friendly tiles (256/128) that still leave >=2 grid steps.

    >=2 steps keeps the x/h/o DMA pipeline busy and gives megacore something to shard on
    v7x. (On v5e, passing block_b=128 explicitly is usually best; 256 matches v6e/v7x.)
    """
    for cand in (256, 128, 64, 32, 16, 8):
        if B % cand == 0 and B // cand >= 2:
            return cand
    for cand in (256, 128, 64, 32, 16, 8):
        if B % cand == 0:
            return cand
    return B


@functools.lru_cache(maxsize=None)
def _vmem_cap_bytes():
    """~80% of physical per-core VMEM (headroom for compiler scratch / semaphores)."""
    try:
        cap = int(pltpu.get_tpu_info().vmem_capacity_bytes)
        return max(16 * 1024 * 1024, int(cap * 0.8))   # ~51 MiB on v7x, ~102 MiB on v5e/v6e
    except Exception:  # pragma: no cover - conservative fallback
        return 64 * 1024 * 1024


@functools.partial(jax.jit, static_argnames=("block_b",))
def gru_cell_forward(x, h, params, *, block_b=None):
    """Pallas-backed GRUImpl.forward(input, hidden, mask=None) using prepared params."""
    B, K = x.shape
    Bh, H = h.shape
    assert Bh == B
    Kp = params["wx_n"].shape[0]
    Hp = params["wh_n"].shape[0]
    assert params["w_rz"].shape == (Kp + Hp, 2 * Hp)
    param_dtype = params["w_rz"].dtype
    out_dtype = x.dtype

    if block_b is None:
        block_b = _pick_block_b(B)
    assert B % block_b == 0, "block_b must divide batch"
    assert block_b == B or block_b % 8 == 0, "batch tile must be a multiple of 8 (sublane)"
    grid = (B // block_b,)

    # Lane-pad activations and ship them in the weight dtype (halves activation DMA bytes).
    if Kp != K:
        x = jnp.pad(x, ((0, 0), (0, Kp - K)))
    if Hp != H:
        h = jnp.pad(h, ((0, 0), (0, Hp - H)))
    xc = x.astype(param_dtype)
    hc = h.astype(param_dtype)

    # Scoped-VMEM budget: single-buffered weights + double-buffered x/h/o tiles + f32 temps.
    w_item = jnp.dtype(param_dtype).itemsize
    o_item = jnp.dtype(out_dtype).itemsize
    weights = ((Kp + Hp) * 2 * Hp + Kp * Hp + Hp * Hp) * w_item + 4 * Hp * 4
    acts = 2 * block_b * (Kp + Hp) * w_item + 2 * block_b * Hp * o_item
    temps = 10 * block_b * Hp * 4
    vmem_limit = int(min(max(2 * (weights + acts + temps), 16 * 1024 * 1024), _vmem_cap_bytes()))

    const_map = lambda i: (0, 0)
    out = pl.pallas_call(
        _gru_cell_kernel,
        out_shape=jax.ShapeDtypeStruct((B, Hp), out_dtype),
        grid_spec=pltpu.PrefetchScalarGridSpec(
            num_scalar_prefetch=0,
            grid=grid,
            in_specs=[
                pl.BlockSpec((block_b, Kp), lambda i: (i, 0)),                       # x tile
                pl.BlockSpec((block_b, Hp), lambda i: (i, 0)),                       # h tile
                # Constant-index resident weights/biases: single-buffered (no 2nd copy).
                pl.BlockSpec((Kp + Hp, 2 * Hp), const_map, pipeline_mode=pl.Buffered(1)),
                pl.BlockSpec((Kp, Hp), const_map, pipeline_mode=pl.Buffered(1)),
                pl.BlockSpec((Hp, Hp), const_map, pipeline_mode=pl.Buffered(1)),
                pl.BlockSpec((1, 2 * Hp), const_map, pipeline_mode=pl.Buffered(1)),
                pl.BlockSpec((1, Hp), const_map, pipeline_mode=pl.Buffered(1)),
                pl.BlockSpec((1, Hp), const_map, pipeline_mode=pl.Buffered(1)),
            ],
            out_specs=pl.BlockSpec((block_b, Hp), lambda i: (i, 0)),
        ),
        compiler_params=pltpu.CompilerParams(
            dimension_semantics=("parallel",),
            vmem_limit_bytes=vmem_limit,
        ),
    )(xc, hc, params["w_rz"], params["wx_n"], params["wh_n"],
      params["b_rz"], params["bx_n"], params["bh_n"])

    # TODO(synk): optional `mask` path of GRUImpl.forward not implemented (mask=None only).
    # TODO(synk): for sequence workloads, add a time-step ("arbitrary") grid axis with the
    # weights resident and the hidden state carried in VMEM scratch, instead of one call/step.
    return out[:, :H] if Hp != H else out


def gru_impl_forward(x, h, wx, wh, bx, bh, *, block_b=None, param_dtype=jnp.bfloat16):
    """Convenience one-shot wrapper (converts weights every call — prefer prepare + forward)."""
    params = prepare_gru_params(wx, wh, bx, bh, param_dtype=param_dtype)
    return gru_cell_forward(x, h, params, block_b=block_b)


def _reference_forward(x, h, wx, wh, bx, bh):
    """Pure-JAX f32 reference mirroring the PyTorch module exactly."""
    H = h.shape[1]
    x_w = x @ wx + bx
    h_u = h @ wh + bh
    r = jax.nn.sigmoid(x_w[:, 0:H] + h_u[:, 0:H])
    z = jax.nn.sigmoid(x_w[:, H:2 * H] + h_u[:, H:2 * H])
    n = jnp.tanh(x_w[:, 2 * H:3 * H] + r * h_u[:, 2 * H:3 * H])
    return z * (n - h) + h


if __name__ == "__main__":
    input_size = 64
    hidden_size = 32
    three_h = MULTIPLIER * hidden_size

    key = jax.random.PRNGKey(0)
    k_x, k_h, k_wx, k_wh, k_bx, k_bh, k_x2, k_h2 = jax.random.split(key, 8)

    # Deterministic parameter init (PyTorch Linear-style uniform bounds).
    bound_x = 1.0 / (input_size ** 0.5)
    bound_h = 1.0 / (hidden_size ** 0.5)
    wx = jax.random.uniform(k_wx, (input_size, three_h), jnp.float32, -bound_x, bound_x)
    wh = jax.random.uniform(k_wh, (hidden_size, three_h), jnp.float32, -bound_h, bound_h)
    if BIAS:
        bx = jax.random.uniform(k_bx, (1, three_h), jnp.float32, -bound_x, bound_x)
        bh = jax.random.uniform(k_bh, (1, three_h), jnp.float32, -bound_h, bound_h)
    else:
        bx = jnp.zeros((1, three_h), jnp.float32)
        bh = jnp.zeros((1, three_h), jnp.float32)

    # Hoisted, cached weight conversion (done once, reused below).
    params_f32 = prepare_gru_params(wx, wh, bx, bh, param_dtype=jnp.float32)
    params_bf16 = prepare_gru_params(wx, wh, bx, bh, param_dtype=jnp.bfloat16)

    # --- Small-shape check (batch=8, single grid step) ---
    batch = 8
    x = jax.random.normal(k_x, (batch, input_size), jnp.float32)
    h = jax.random.normal(k_h, (batch, hidden_size), jnp.float32)
    ref = _reference_forward(x, h, wx, wh, bx, bh)

    out_f32 = jax.block_until_ready(gru_cell_forward(x, h, params_f32))
    assert out_f32.shape == (batch, hidden_size)
    assert jnp.allclose(out_f32, ref, atol=2e-5, rtol=2e-5), "f32 path mismatch vs reference"

    out_bf16 = jax.block_until_ready(gru_cell_forward(x, h, params_bf16))
    assert out_bf16.shape == (batch, hidden_size)
    assert jnp.allclose(out_bf16, ref, atol=5e-2, rtol=5e-2), "bf16 path mismatch vs reference"

    # --- Multi-tile check (batch=64 -> block_b=32, grid of 2 pipelined steps) ---
    batch2 = 64
    x2 = jax.random.normal(k_x2, (batch2, input_size), jnp.float32)
    h2 = jax.random.normal(k_h2, (batch2, hidden_size), jnp.float32)
    ref2 = _reference_forward(x2, h2, wx, wh, bx, bh)
    out2 = jax.block_until_ready(gru_cell_forward(x2, h2, params_f32))
    assert out2.shape == (batch2, hidden_size)
    assert jnp.allclose(out2, ref2, atol=2e-5, rtol=2e-5), "multi-tile path mismatch vs reference"

    print("KERNEL_OK")
</pallas_src>

<mosaic_0001>
module attributes {stable_mosaic.version = 11 : i64} {
  func.func @_gru_cell_kernel(%arg0: i32, %arg1: memref<8x128xf32, #tpu.memory_space<vmem>>, %arg2: memref<8x128xf32, #tpu.memory_space<vmem>>, %arg3: memref<256x256xf32, #tpu.memory_space<vmem>>, %arg4: memref<128x128xf32, #tpu.memory_space<vmem>>, %arg5: memref<128x128xf32, #tpu.memory_space<vmem>>, %arg6: memref<1x256xf32, #tpu.memory_space<vmem>>, %arg7: memref<1x128xf32, #tpu.memory_space<vmem>>, %arg8: memref<1x128xf32, #tpu.memory_space<vmem>>, %arg9: memref<8x128xf32, #tpu.memory_space<vmem>>) attributes {dimension_semantics = [#tpu.dimension_semantics<parallel>], iteration_bounds = array<i64: 1>, scalar_prefetch = 0 : i64, scratch_operands = 0 : i64, tpu.core_type = #tpu.core_type<tc>, window_params = [{transform_indices = @transform_0, window_bounds = array<i64: 8, 128>}, {transform_indices = @transform_1, window_bounds = array<i64: 8, 128>}, {pipeline_mode = #tpu.pipeline_mode<synchronous>, transform_indices = @transform_2, window_bounds = array<i64: 256, 256>}, {pipeline_mode = #tpu.pipeline_mode<synchronous>, transform_indices = @transform_3, window_bounds = array<i64: 128, 128>}, {pipeline_mode = #tpu.pipeline_mode<synchronous>, transform_indices = @transform_4, window_bounds = array<i64: 128, 128>}, {pipeline_mode = #tpu.pipeline_mode<synchronous>, transform_indices = @transform_5, window_bounds = array<i64: 1, 256>}, {pipeline_mode = #tpu.pipeline_mode<synchronous>, transform_indices = @transform_6, window_bounds = array<i64: 1, 128>}, {pipeline_mode = #tpu.pipeline_mode<synchronous>, transform_indices = @transform_7, window_bounds = array<i64: 1, 128>}, {transform_indices = @transform_8, window_bounds = array<i64: 8, 128>}]} {
    %c0 = arith.constant 0 : index
    %c0_0 = arith.constant 0 : index
    %0 = vector.load %arg1[%c0, %c0_0] : memref<8x128xf32, #tpu.memory_space<vmem>>, vector<8x128xf32>
    %c0_1 = arith.constant 0 : index
    %c0_2 = arith.constant 0 : index
    %1 = vector.load %arg2[%c0_1, %c0_2] : memref<8x128xf32, #tpu.memory_space<vmem>>, vector<8x128xf32>
    %2 = tpu.concatenate %0, %1 in 1 : vector<8x128xf32>, vector<8x128xf32> -> vector<8x256xf32>
    %c0_3 = arith.constant 0 : index
    %c0_4 = arith.constant 0 : index
    %3 = vector.load %arg3[%c0_3, %c0_4] : memref<256x256xf32, #tpu.memory_space<vmem>>, vector<256x256xf32>
    %cst = arith.constant dense<0.000000e+00> : vector<8x256xf32>
    %4 = tpu.matmul %2, %3, %cst {dimension_numbers = #tpu.dot_dimension_numbers<[1], [0], [0], [1], [0, 0, 1, 1], [], []>} : vector<8x256xf32>, vector<256x256xf32>, vector<8x256xf32> -> vector<8x256xf32>
    %c0_5 = arith.constant 0 : index
    %c0_6 = arith.constant 0 : index
    %5 = vector.load %arg6[%c0_5, %c0_6] : memref<1x256xf32, #tpu.memory_space<vmem>>, vector<1x256xf32>
    %6 = vector.broadcast %5 : vector<1x256xf32> to vector<8x256xf32>
    %7 = arith.addf %4, %6 : vector<8x256xf32>
    %8 = vector.extract_strided_slice %7 {offsets = [0, 0], sizes = [8, 128], strides = [1, 1]} : vector<8x256xf32> to vector<8x128xf32>
    %cst_7 = arith.constant 5.000000e-01 : f32
    %9 = vector.broadcast %cst_7 : f32 to vector<8x128xf32>
    %10 = arith.mulf %9, %8 : vector<8x128xf32>
    %11 = math.tanh %10 : vector<8x128xf32>
    %cst_8 = arith.constant 5.000000e-01 : f32
    %12 = vector.broadcast %cst_8 : f32 to vector<8x128xf32>
    %13 = arith.mulf %12, %11 : vector<8x128xf32>
    %cst_9 = arith.constant 5.000000e-01 : f32
    %14 = vector.broadcast %cst_9 : f32 to vector<8x128xf32>
    %15 = arith.addf %13, %14 : vector<8x128xf32>
    %c0_10 = arith.constant 0 : index
    %c0_11 = arith.constant 0 : index
    %16 = vector.load %arg5[%c0_10, %c0_11] : memref<128x128xf32, #tpu.memory_space<vmem>>, vector<128x128xf32>
    %cst_12 = arith.constant dense<0.000000e+00> : vector<8x128xf32>
    %17 = tpu.matmul %1, %16, %cst_12 {dimension_numbers = #tpu.dot_dimension_numbers<[1], [0], [0], [1], [0, 0, 1, 1], [], []>} : vector<8x128xf32>, vector<128x128xf32>, vector<8x128xf32> -> vector<8x128xf32>
    %c0_13 = arith.constant 0 : index
    %c0_14 = arith.constant 0 : index
    %18 = vector.load %arg8[%c0_13, %c0_14] : memref<1x128xf32, #tpu.memory_space<vmem>>, vector<1x128xf32>
    %19 = vector.broadcast %18 : vector<1x128xf32> to vector<8x128xf32>
    %20 = arith.addf %17, %19 : vector<8x128xf32>
    %c0_15 = arith.constant 0 : index
    %c0_16 = arith.constant 0 : index
    %21 = vector.load %arg4[%c0_15, %c0_16] : memref<128x128xf32, #tpu.memory_space<vmem>>, vector<128x128xf32>
    %cst_17 = arith.constant dense<0.000000e+00> : vector<8x128xf32>
    %22 = tpu.matmul %0, %21, %cst_17 {dimension_numbers = #tpu.dot_dimension_numbers<[1], [0], [0], [1], [0, 0, 1, 1], [], []>} : vector<8x128xf32>, vector<128x128xf32>, vector<8x128xf32> -> vector<8x128xf32>
    %c0_18 = arith.constant 0 : index
    %c0_19 = arith.constant 0 : index
    %23 = vector.load %arg7[%c0_18, %c0_19] : memref<1x128xf32, #tpu.memory_space<vmem>>, vector<1x128xf32>
    %24 = vector.broadcast %23 : vector<1x128xf32> to vector<8x128xf32>
    %25 = arith.addf %22, %24 : vector<8x128xf32>
    %26 = arith.mulf %15, %20 : vector<8x128xf32>
    %27 = arith.addf %25, %26 : vector<8x128xf32>
    %28 = math.tanh %27 : vector<8x128xf32>
    %29 = vector.extract_strided_slice %7 {offsets = [0, 128], sizes = [8, 128], strides = [1, 1]} : vector<8x256xf32> to vector<8x128xf32>
    %cst_20 = arith.constant 5.000000e-01 : f32
    %30 = vector.broadcast %cst_20 : f32 to vector<8x128xf32>
    %31 = arith.mulf %30, %29 : vector<8x128xf32>
    %32 = math.tanh %31 : vector<8x128xf32>
    %cst_21 = arith.constant 5.000000e-01 : f32
    %33 = vector.broadcast %cst_21 : f32 to vector<8x128xf32>
    %34 = arith.mulf %33, %32 : vector<8x128xf32>
    %cst_22 = arith.constant 5.000000e-01 : f32
    %35 = vector.broadcast %cst_22 : f32 to vector<8x128xf32>
    %36 = arith.addf %34, %35 : vector<8x128xf32>
    %37 = arith.subf %28, %1 : vector<8x128xf32>
    %38 = arith.mulf %36, %37 : vector<8x128xf32>
    %39 = arith.addf %38, %1 : vector<8x128xf32>
    %c0_23 = arith.constant 0 : index
    %c0_24 = arith.constant 0 : index
    %40 = vector.load %arg9[%c0_23, %c0_24] : memref<8x128xf32, #tpu.memory_space<vmem>>, vector<8x128xf32>
    tpu.vector_store %arg9[%c0_23, %c0_24], %39 {strides = array<i32>} : memref<8x128xf32, #tpu.memory_space<vmem>>, vector<8x128xf32>,
    return
  }
  func.func @transform_0(%arg0: i32) -> (i32, i32) {
    %c0_i32 = arith.constant 0 : i32
    %c0_i32_0 = arith.constant 0 : i32
    return %arg0, %c0_i32 : i32, i32
  }
  func.func @transform_1(%arg0: i32) -> (i32, i32) {
    %c0_i32 = arith.constant 0 : i32
    %c0_i32_0 = arith.constant 0 : i32
    return %arg0, %c0_i32 : i32, i32
  }
  func.func @transform_2(%arg0: i32) -> (i32, i32) {
    %c0_i32 = arith.constant 0 : i32
    %c0_i32_0 = arith.constant 0 : i32
    %c0_i32_1 = arith.constant 0 : i32
    return %c0_i32, %c0_i32_0 : i32, i32
  }
  func.func @transform_3(%arg0: i32) -> (i32, i32) {
    %c0_i32 = arith.constant 0 : i32
    %c0_i32_0 = arith.constant 0 : i32
    %c0_i32_1 = arith.constant 0 : i32
    return %c0_i32, %c0_i32_0 : i32, i32
  }
  func.func @transform_4(%arg0: i32) -> (i32, i32) {
    %c0_i32 = arith.constant 0 : i32
    %c0_i32_0 = arith.constant 0 : i32
    %c0_i32_1 = arith.constant 0 : i32
    return %c0_i32, %c0_i32_0 : i32, i32
  }
  func.func @transform_5(%arg0: i32) -> (i32, i32) {
    %c0_i32 = arith.constant 0 : i32
    %c0_i32_0 = arith.constant 0 : i32
    %c0_i32_1 = arith.constant 0 : i32
    return %c0_i32, %c0_i32_0 : i32, i32
  }
  func.func @transform_6(%arg0: i32) -> (i32, i32) {
    %c0_i32 = arith.constant 0 : i32
    %c0_i32_0 = arith.constant 0 : i32
    %c0_i32_1 = arith.constant 0 : i32
    return %c0_i32, %c0_i32_0 : i32, i32
  }
  func.func @transform_7(%arg0: i32) -> (i32, i32) {
    %c0_i32 = arith.constant 0 : i32
    %c0_i32_0 = arith.constant 0 : i32
    %c0_i32_1 = arith.constant 0 : i32
    return %c0_i32, %c0_i32_0 : i32, i32
  }
  func.func @transform_8(%arg0: i32) -> (i32, i32) {
    %c0_i32 = arith.constant 0 : i32
    %c0_i32_0 = arith.constant 0 : i32
    return %arg0, %c0_i32 : i32, i32
  }
}

</mosaic_0001>

<llo_original>
// kernel: gru_cell_forward.1
$region0: #{gru_cell_forward.1}
  #allocation0 [shape = 'u32[]', space=smem, size = 0x4, offset = 0x4, fixed_abs, tag = 'smem constant byte address 0x4 - core index']
  #allocation1 [shape = 'u32[144,128]{1,0:T(1,128)}', space=vmem, size = 0x12000, scoped, tag = 'internal scratch']
  %s0 = inlined_call_operand.vmem [shape: f32[8,128], index: 0, kind: input, shape index: {}]
  %s1 = inlined_call_operand.vmem [shape: f32[8,128], index: 1, kind: input, shape index: {}]
  %s2 = inlined_call_operand.hbm [shape: f32[256,256], index: 2, kind: input, shape index: {}]
  %s3 = inlined_call_operand.hbm [shape: f32[128,128], index: 3, kind: input, shape index: {}]
  %s4 = inlined_call_operand.hbm [shape: f32[128,128], index: 4, kind: input, shape index: {}]
  %s5 = inlined_call_operand.vmem [shape: f32[1,256], index: 5, kind: input, shape index: {}]
  %s6 = inlined_call_operand.vmem [shape: f32[1,128], index: 6, kind: input, shape index: {}]
  %s7 = inlined_call_operand.vmem [shape: f32[1,128], index: 7, kind: input, shape index: {}]
  %s8 = inlined_call_operand.hbm [shape: f32[8,128], index: 8, kind: output, shape index: {}]
  %s9 = sld [smem:[#allocation0]]
  $region54: #{gru_cell_forward.1} parent=0
    _
  %s11 = ssub.s32 1, %s9
  %s12 = scalar_select 0, %s11, %s9
  $region1: #{gru_cell_forward.1} parent=0
    #allocation2 [shape = 'u8[262144]{0}', space=vmem, size = 0x40000, scoped, tag = 'input window, operand 2, single buffered']
    #allocation3 [shape = 's32[1]{0}', space=sflag, size = 0x4, scoped, tag = 'scoped memory for gru_cell_forward.1']
    #allocation4 [shape = 's32[1]{0}', space=sflag, size = 0x4, scoped, tag = 'scoped memory for gru_cell_forward.1']
    #allocation5 [shape = 'u8[65536]{0}', space=vmem, size = 0x10000, scoped, tag = 'input window, operand 3, single buffered']
    #allocation6 [shape = 's32[1]{0}', space=sflag, size = 0x4, scoped, tag = 'scoped memory for gru_cell_forward.1']
    #allocation7 [shape = 'u8[65536]{0}', space=vmem, size = 0x10000, scoped, tag = 'input window, operand 4, single buffered']
    #allocation8 [shape = 'u8[4096]{0}', space=vmem, size = 0x1000, scoped, tag = 'output window, operand 0, single buffered']
    %13 = vsyncpa [#allocation3], 0
    %14 = vsyncpa [#allocation6], 0
    %15 = vsyncpa [#allocation4], 0
    // Predicated region
    $region2: #{gru_cell_forward.1} parent=1 // pred_check
      _
    $region3: #{gru_cell_forward.1} parent=1 // pred_check_branch
      %17 = sbr.rel (0) target = $region5
    $region4: #{gru_cell_forward.1} parent=1 // pred_region
      _
    $region5: #{gru_cell_forward.1} parent=1 // pred_fallthru
      _
    // Predicated region
    $region6: #{gru_cell_forward.1} parent=1 // pred_check
      _
    $region7: #{gru_cell_forward.1} parent=1 // pred_check_branch
      %19 = sbr.rel (0) target = $region9
    $region8: #{gru_cell_forward.1} parent=1 // pred_region
      _
    $region9: #{gru_cell_forward.1} parent=1 // pred_fallthru
      _
    // Predicated region
    $region10: #{gru_cell_forward.1} parent=1 // pred_check
      _
    $region11: #{gru_cell_forward.1} parent=1 // pred_check_branch
      %21 = sbr.rel (0) target = $region13
    $region12: #{gru_cell_forward.1} parent=1 // pred_region
      %s23 = ssub.s32 8192, 8192
      %24 = vsyncadd [#allocation3], %s23
      %s25 = sshll.u32 [#allocation2], 4
      %s26 = int_to_ptr.vmem [resolvable:$true] %s25
      %31 = dma.hbm_to_vmem [thread:$0]  %s2, 8192, %s26, [#allocation3], 256, 256, 16
    $region13: #{gru_cell_forward.1} parent=1 // pred_fallthru
      _
    // Predicated region
    $region14: #{gru_cell_forward.1} parent=1 // pred_check
      _
    $region15: #{gru_cell_forward.1} parent=1 // pred_check_branch
      %33 = sbr.rel (0) target = $region17
    $region16: #{gru_cell_forward.1} parent=1 // pred_region
      %s35 = ssub.s32 2048, 2048
      %36 = vsyncadd [#allocation6], %s35
      %s37 = sshll.u32 [#allocation5], 4
      %s38 = int_to_ptr.vmem [resolvable:$true] %s37
      %43 = dma.hbm_to_vmem [thread:$0]  %s3, 2048, %s38, [#allocation6], 128, 128, 8
    $region17: #{gru_cell_forward.1} parent=1 // pred_fallthru
      _
    // Predicated region
    $region18: #{gru_cell_forward.1} parent=1 // pred_check
      _
    $region19: #{gru_cell_forward.1} parent=1 // pred_check_branch
      %45 = sbr.rel (0) target = $region21
    $region20: #{gru_cell_forward.1} parent=1 // pred_region
      %s47 = ssub.s32 2048, 2048
      %48 = vsyncadd [#allocation6], %s47
      %s49 = sshll.u32 [#allocation7], 4
      %s50 = int_to_ptr.vmem [resolvable:$true] %s49
      %55 = dma.hbm_to_vmem [thread:$0]  %s4, 2048, %s50, [#allocation6], 128, 128, 8
    $region21: #{gru_cell_forward.1} parent=1 // pred_fallthru
      _
    // Predicated region
    $region22: #{gru_cell_forward.1} parent=1 // pred_check
      _
    $region23: #{gru_cell_forward.1} parent=1 // pred_check_branch
      %57 = sbr.rel (0) target = $region25
    $region24: #{gru_cell_forward.1} parent=1 // pred_region
      _
    $region25: #{gru_cell_forward.1} parent=1 // pred_fallthru
      _
    // Predicated region
    $region26: #{gru_cell_forward.1} parent=1 // pred_check
      _
    $region27: #{gru_cell_forward.1} parent=1 // pred_check_branch
      %59 = sbr.rel (0) target = $region29
    $region28: #{gru_cell_forward.1} parent=1 // pred_region
      _
    $region29: #{gru_cell_forward.1} parent=1 // pred_fallthru
      _
    // Predicated region
    $region30: #{gru_cell_forward.1} parent=1 // pred_check
      _
    $region31: #{gru_cell_forward.1} parent=1 // pred_check_branch
      %61 = sbr.rel (0) target = $region33
    $region32: #{gru_cell_forward.1} parent=1 // pred_region
      _
    $region33: #{gru_cell_forward.1} parent=1 // pred_fallthru
      _
    // Predicated region
    $region34: #{gru_cell_forward.1} parent=1 // pred_check
      _
    $region35: #{gru_cell_forward.1} parent=1 // pred_check_branch
      %63 = sbr.rel (0) target = $region37
    $region36: #{gru_cell_forward.1} parent=1 // pred_region
      %64 = dma.done [#allocation3], 8192
    $region37: #{gru_cell_forward.1} parent=1 // pred_fallthru
      _
    // Predicated region
    $region38: #{gru_cell_forward.1} parent=1 // pred_check
      _
    $region39: #{gru_cell_forward.1} parent=1 // pred_check_branch
      %66 = sbr.rel (0) target = $region41
    $region40: #{gru_cell_forward.1} parent=1 // pred_region
      %67 = dma.done [#allocation6], 2048
    $region41: #{gru_cell_forward.1} parent=1 // pred_fallthru
      _
    // Predicated region
    $region42: #{gru_cell_forward.1} parent=1 // pred_check
      _
    $region43: #{gru_cell_forward.1} parent=1 // pred_check_branch
      %69 = sbr.rel (0) target = $region45
    $region44: #{gru_cell_forward.1} parent=1 // pred_region
      %70 = dma.done [#allocation6], 2048
    $region45: #{gru_cell_forward.1} parent=1 // pred_fallthru
      _
    %v71 = vld [vmem:[%s0] sm:$0xff]
    %v72 = vld [vmem:[%s1] sm:$0xff]
    %v73 = vld [vmem:[#allocation2] sm:$0xff]
    %v74 = vld [vmem:[#allocation2 + $0x8] sm:$0xff]
    %v75 = vld [vmem:[#allocation2 + $0x10] sm:$0xff]
    %v76 = vld [vmem:[#allocation2 + $0x18] sm:$0xff]
    %v77 = vld [vmem:[#allocation2 + $0x20] sm:$0xff]
    %v78 = vld [vmem:[#allocation2 + $0x28] sm:$0xff]
    %v79 = vld [vmem:[#allocation2 + $0x30] sm:$0xff]
    %v80 = vld [vmem:[#allocation2 + $0x38] sm:$0xff]
    %v81 = vld [vmem:[#allocation2 + $0x40] sm:$0xff]
    %v82 = vld [vmem:[#allocation2 + $0x48] sm:$0xff]
    %v83 = vld [vmem:[#allocation2 + $0x50] sm:$0xff]
    %v84 = vld [vmem:[#allocation2 + $0x58] sm:$0xff]
    %v85 = vld [vmem:[#allocation2 + $0x60] sm:$0xff]
    %v86 = vld [vmem:[#allocation2 + $0x68] sm:$0xff]
    %v87 = vld [vmem:[#allocation2 + $0x70] sm:$0xff]
    %v88 = vld [vmem:[#allocation2 + $0x78] sm:$0xff]
    %v89 = vld [vmem:[#allocation2 + $0x80] sm:$0xff]
    %v90 = vld [vmem:[#allocation2 + $0x88] sm:$0xff]
    %v91 = vld [vmem:[#allocation2 + $0x90] sm:$0xff]
    %v92 = vld [vmem:[#allocation2 + $0x98] sm:$0xff]
    %v93 = vld [vmem:[#allocation2 + $0xa0] sm:$0xff]
    %v94 = vld [vmem:[#allocation2 + $0xa8] sm:$0xff]
    %v95 = vld [vmem:[#allocation2 + $0xb0] sm:$0xff]
    %v96 = vld [vmem:[#allocation2 + $0xb8] sm:$0xff]
    %v97 = vld [vmem:[#allocation2 + $0xc0] sm:$0xff]
    %v98 = vld [vmem:[#allocation2 + $0xc8] sm:$0xff]
    %v99 = vld [vmem:[#allocation2 + $0xd0] sm:$0xff]
    %v100 = vld [vmem:[#allocation2 + $0xd8] sm:$0xff]
    %v101 = vld [vmem:[#allocation2 + $0xe0] sm:$0xff]
    %v102 = vld [vmem:[#allocation2 + $0xe8] sm:$0xff]
    %v103 = vld [vmem:[#allocation2 + $0xf0] sm:$0xff]
    %v104 = vld [vmem:[#allocation2 + $0xf8] sm:$0xff]
    %v105 = vld [vmem:[#allocation2 + $0x100] sm:$0xff]
    %v106 = vld [vmem:[#allocation2 + $0x108] sm:$0xff]
    %v107 = vld [vmem:[#allocation2 + $0x110] sm:$0xff]
    %v108 = vld [vmem:[#allocation2 + $0x118] sm:$0xff]
    %v109 = vld [vmem:[#allocation2 + $0x120] sm:$0xff]
    %v110 = vld [vmem:[#allocation2 + $0x128] sm:$0xff]
    %v111 = vld [vmem:[#allocation2 + $0x130] sm:$0xff]
    %v112 = vld [vmem:[#allocation2 + $0x138] sm:$0xff]
    %v113 = vld [vmem:[#allocation2 + $0x140] sm:$0xff]
    %v114 = vld [vmem:[#allocation2 + $0x148] sm:$0xff]
    %v115 = vld [vmem:[#allocation2 + $0x150] sm:$0xff]
    %v116 = vld [vmem:[#allocation2 + $0x158] sm:$0xff]
    %v117 = vld [vmem:[#allocation2 + $0x160] sm:$0xff]
    %v118 = vld [vmem:[#allocation2 + $0x168] sm:$0xff]
    %v119 = vld [vmem:[#allocation2 + $0x170] sm:$0xff]
    %v120 = vld [vmem:[#allocation2 + $0x178] sm:$0xff]
    %v121 = vld [vmem:[#allocation2 + $0x180] sm:$0xff]
    %v122 = vld [vmem:[#allocation2 + $0x188] sm:$0xff]
    %v123 = vld [vmem:[#allocation2 + $0x190] sm:$0xff]
    %v124 = vld [vmem:[#allocation2 + $0x198] sm:$0xff]
    %v125 = vld [vmem:[#allocation2 + $0x1a0] sm:$0xff]
    %v126 = vld [vmem:[#allocation2 + $0x1a8] sm:$0xff]
    %v127 = vld [vmem:[#allocation2 + $0x1b0] sm:$0xff]
    %v128 = vld [vmem:[#allocation2 + $0x1b8] sm:$0xff]
    %v129 = vld [vmem:[#allocation2 + $0x1c0] sm:$0xff]
    %v130 = vld [vmem:[#allocation2 + $0x1c8] sm:$0xff]
    %v131 = vld [vmem:[#allocation2 + $0x1d0] sm:$0xff]
    %v132 = vld [vmem:[#allocation2 + $0x1d8] sm:$0xff]
    %v133 = vld [vmem:[#allocation2 + $0x1e0] sm:$0xff]
    %v134 = vld [vmem:[#allocation2 + $0x1e8] sm:$0xff]
    %v135 = vld [vmem:[#allocation2 + $0x1f0] sm:$0xff]
    %v136 = vld [vmem:[#allocation2 + $0x1f8] sm:$0xff]
    %v137 = vld [vmem:[%s5] sm:$0x3]
    %v139 = vlaneseq
    %v140 = vshrl.u32 %v139, 7
    %v141 = vsub.s32 0, %v140
    %v142 = vrot.slane %v137, %v141
    %v143 = vlaneseq
    %v144 = vshrl.u32 %v143, 7
    %v145 = vsub.s32 1, %v144
    %v146 = vrot.slane %v137, %v145
    %149 = vmatprep.subr.mxu0 %v74
    %150 = vmatpush1.msra.mxu0 %v73
    %151 = vmatprep.subr.mxu0 %v76
    %152 = vmatpush1.msra.mxu0 %v75
    %153 = vmatprep.subr.mxu0 %v78
    %154 = vmatpush1.msra.mxu0 %v77
    %155 = vmatprep.subr.mxu0 %v80
    %156 = vmatpush1.msra.mxu0 %v79
    %157 = vmatprep.subr.mxu0 %v82
    %158 = vmatpush1.msra.mxu0 %v81
    %159 = vmatprep.subr.mxu0 %v84
    %160 = vmatpush1.msra.mxu0 %v83
    %161 = vmatprep.subr.mxu0 %v86
    %162 = vmatpush1.msra.mxu0 %v85
    %163 = vmatprep.subr.mxu0 %v88
    %164 = vmatpush1.msra.mxu0 %v87
    %165 = vmatprep.subr.mxu0 %v90
    %166 = vmatpush1.msra.mxu0 %v89
    %167 = vmatprep.subr.mxu0 %v92
    %168 = vmatpush1.msra.mxu0 %v91
    %169 = vmatprep.subr.mxu0 %v94
    %170 = vmatpush1.msra.mxu0 %v93
    %171 = vmatprep.subr.mxu0 %v96
    %172 = vmatpush1.msra.mxu0 %v95
    %173 = vmatprep.subr.mxu0 %v98
    %174 = vmatpush1.msra.mxu0 %v97
    %175 = vmatprep.subr.mxu0 %v100
    %176 = vmatpush1.msra.mxu0 %v99
    %177 = vmatprep.subr.mxu0 %v102
    %178 = vmatpush1.msra.mxu0 %v101
    %179 = vmatprep.subr.mxu0 %v104
    %180 = vmatpush1.msra.mxu0 %v103
    %181 = vmatprep.subr.mxu0 %v106
    %182 = vmatpush1.msra.mxu0 %v105
    %183 = vmatprep.subr.mxu0 %v108
    %184 = vmatpush1.msra.mxu0 %v107
    %185 = vmatprep.subr.mxu0 %v110
    %186 = vmatpush1.msra.mxu0 %v109
    %187 = vmatprep.subr.mxu0 %v112
    %188 = vmatpush1.msra.mxu0 %v111
    %189 = vmatprep.subr.mxu0 %v114
    %190 = vmatpush1.msra.mxu0 %v113
    %191 = vmatprep.subr.mxu0 %v116
    %192 = vmatpush1.msra.mxu0 %v115
    %193 = vmatprep.subr.mxu0 %v118
    %194 = vmatpush1.msra.mxu0 %v117
    %195 = vmatprep.subr.mxu0 %v120
    %196 = vmatpush1.msra.mxu0 %v119
    %197 = vmatprep.subr.mxu0 %v122
    %198 = vmatpush1.msra.mxu0 %v121
    %199 = vmatprep.subr.mxu0 %v124
    %200 = vmatpush1.msra.mxu0 %v123
    %201 = vmatprep.subr.mxu0 %v126
    %202 = vmatpush1.msra.mxu0 %v125
    %203 = vmatprep.subr.mxu0 %v128
    %204 = vmatpush1.msra.mxu0 %v127
    %205 = vmatprep.subr.mxu0 %v130
    %206 = vmatpush1.msra.mxu0 %v129
    %207 = vmatprep.subr.mxu0 %v132
    %208 = vmatpush1.msra.mxu0 %v131
    %209 = vmatprep.subr.mxu0 %v134
    %210 = vmatpush1.msra.mxu0 %v133
    %211 = vmatprep.subr.mxu0 %v136
    %212 = vmatpush1.msra.mxu0 %v135
    %213 = vmatprep.mubr.f32.mxu0 %v72
    %214 = vmatmul.mubr.f32.gmra.mrb[0].mxu0 %v71
    %v215 = vpop.f32.mrb[0].mxu0
    %v216 = vadd.f32 %v142, %v215
    %v217 = vpop.f32.mrb[0].mxu0
    %v218 = vadd.f32 %v146, %v217
    %219 = vdwg.mxu0
    %v220 = vmul.f32 %v216, 0.5
    %v221 = vtanh.pop %v220
    %v222 = vmul.f32 %v221, 0.5
    %v223 = vadd.f32 %v222, 0.5
    %v224 = vld [vmem:[#allocation7] sm:$0xff]
    %v225 = vld [vmem:[#allocation7 + $0x8] sm:$0xff]
    %v226 = vld [vmem:[#allocation7 + $0x10] sm:$0xff]
    %v227 = vld [vmem:[#allocation7 + $0x18] sm:$0xff]
    %v228 = vld [vmem:[#allocation7 + $0x20] sm:$0xff]
    %v229 = vld [vmem:[#allocation7 + $0x28] sm:$0xff]
    %v230 = vld [vmem:[#allocation7 + $0x30] sm:$0xff]
    %v231 = vld [vmem:[#allocation7 + $0x38] sm:$0xff]
    %v232 = vld [vmem:[#allocation7 + $0x40] sm:$0xff]
    %v233 = vld [vmem:[#allocation7 + $0x48] sm:$0xff]
    %v234 = vld [vmem:[#allocation7 + $0x50] sm:$0xff]
    %v235 = vld [vmem:[#allocation7 + $0x58] sm:$0xff]
    %v236 = vld [vmem:[#allocation7 + $0x60] sm:$0xff]
    %v237 = vld [vmem:[#allocation7 + $0x68] sm:$0xff]
    %v238 = vld [vmem:[#allocation7 + $0x70] sm:$0xff]
    %v239 = vld [vmem:[#allocation7 + $0x78] sm:$0xff]
    %v240 = vld [vmem:[%s7] sm:$0x1]
    %v242 = vlaneseq
    %v243 = vshrl.u32 %v242, 7
    %v244 = vsub.s32 0, %v243
    %v245 = vrot.slane %v240, %v244
    %247 = vmatprep.subr.mxu0 0.0
    %248 = vmatpush1.msra.mxu0 %v224
    %249 = vmatprep.subr.mxu0 0.0
    %250 = vmatpush1.msra.mxu0 %v225
    %251 = vmatprep.subr.mxu0 0.0
    %252 = vmatpush1.msra.mxu0 %v226
    %253 = vmatprep.subr.mxu0 0.0
    %254 = vmatpush1.msra.mxu0 %v227
    %255 = vmatprep.subr.mxu0 0.0
    %256 = vmatpush1.msra.mxu0 %v228
    %257 = vmatprep.subr.mxu0 0.0
    %258 = vmatpush1.msra.mxu0 %v229
    %259 = vmatprep.subr.mxu0 0.0
    %260 = vmatpush1.msra.mxu0 %v230
    %261 = vmatprep.subr.mxu0 0.0
    %262 = vmatpush1.msra.mxu0 %v231
    %263 = vmatprep.subr.mxu0 0.0
    %264 = vmatpush1.msra.mxu0 %v232
    %265 = vmatprep.subr.mxu0 0.0
    %266 = vmatpush1.msra.mxu0 %v233
    %267 = vmatprep.subr.mxu0 0.0
    %268 = vmatpush1.msra.mxu0 %v234
    %269 = vmatprep.subr.mxu0 0.0
    %270 = vmatpush1.msra.mxu0 %v235
    %271 = vmatprep.subr.mxu0 0.0
    %272 = vmatpush1.msra.mxu0 %v236
    %273 = vmatprep.subr.mxu0 0.0
    %274 = vmatpush1.msra.mxu0 %v237
    %275 = vmatprep.subr.mxu0 0.0
    %276 = vmatpush1.msra.mxu0 %v238
    %277 = vmatprep.subr.mxu0 0.0
    %278 = vmatpush1.msra.mxu0 %v239
    %279 = vmatprep.subr.mxu0 0.0
    %280 = vmatpush1.msra.mxu0 0.0
    %281 = vmatprep.subr.mxu0 0.0
    %282 = vmatpush1.msra.mxu0 0.0
    %283 = vmatprep.subr.mxu0 0.0
    %284 = vmatpush1.msra.mxu0 0.0
    %285 = vmatprep.subr.mxu0 0.0
    %286 = vmatpush1.msra.mxu0 0.0
    %287 = vmatprep.subr.mxu0 0.0
    %288 = vmatpush1.msra.mxu0 0.0
    %289 = vmatprep.subr.mxu0 0.0
    %290 = vmatpush1.msra.mxu0 0.0
    %291 = vmatprep.subr.mxu0 0.0
    %292 = vmatpush1.msra.mxu0 0.0
    %293 = vmatprep.subr.mxu0 0.0
    %294 = vmatpush1.msra.mxu0 0.0
    %295 = vmatprep.subr.mxu0 0.0
    %296 = vmatpush1.msra.mxu0 0.0
    %297 = vmatprep.subr.mxu0 0.0
    %298 = vmatpush1.msra.mxu0 0.0
    %299 = vmatprep.subr.mxu0 0.0
    %300 = vmatpush1.msra.mxu0 0.0
    %301 = vmatprep.subr.mxu0 0.0
    %302 = vmatpush1.msra.mxu0 0.0
    %303 = vmatprep.subr.mxu0 0.0
    %304 = vmatpush1.msra.mxu0 0.0
    %305 = vmatprep.subr.mxu0 0.0
    %306 = vmatpush1.msra.mxu0 0.0
    %307 = vmatprep.subr.mxu0 0.0
    %308 = vmatpush1.msra.mxu0 0.0
    %309 = vmatprep.subr.mxu0 0.0
    %310 = vmatpush1.msra.mxu0 0.0
    %311 = vmatprep.mubr.f32.mxu0 0.0
    %312 = vmatmul.mubr.f32.gmra.mrb[0].mxu0 %v72
    %v313 = vpop.f32.mrb[0].mxu0
    %v314 = vadd.f32 %v245, %v313
    %v315 = vpop.f32.mrb[0].mxu0
    %316 = vdwg.mxu0
    %v317 = vld [vmem:[#allocation5] sm:$0xff]
    %v318 = vld [vmem:[#allocation5 + $0x8] sm:$0xff]
    %v319 = vld [vmem:[#allocation5 + $0x10] sm:$0xff]
    %v320 = vld [vmem:[#allocation5 + $0x18] sm:$0xff]
    %v321 = vld [vmem:[#allocation5 + $0x20] sm:$0xff]
    %v322 = vld [vmem:[#allocation5 + $0x28] sm:$0xff]
    %v323 = vld [vmem:[#allocation5 + $0x30] sm:$0xff]
    %v324 = vld [vmem:[#allocation5 + $0x38] sm:$0xff]
    %v325 = vld [vmem:[#allocation5 + $0x40] sm:$0xff]
    %v326 = vld [vmem:[#allocation5 + $0x48] sm:$0xff]
    %v327 = vld [vmem:[#allocation5 + $0x50] sm:$0xff]
    %v328 = vld [vmem:[#allocation5 + $0x58] sm:$0xff]
    %v329 = vld [vmem:[#allocation5 + $0x60] sm:$0xff]
    %v330 = vld [vmem:[#allocation5 + $0x68] sm:$0xff]
    %v331 = vld [vmem:[#allocation5 + $0x70] sm:$0xff]
    %v332 = vld [vmem:[#allocation5 + $0x78] sm:$0xff]
    %v333 = vld [vmem:[%s6] sm:$0x1]
    %v335 = vlaneseq
    %v336 = vshrl.u32 %v335, 7
    %v337 = vsub.s32 0, %v336
    %v338 = vrot.slane %v333, %v337
    %340 = vmatprep.subr.mxu0 0.0
    %341 = vmatpush1.msra.mxu0 %v317
    %342 = vmatprep.subr.mxu0 0.0
    %343 = vmatpush1.msra.mxu0 %v318
    %344 = vmatprep.subr.mxu0 0.0
    %345 = vmatpush1.msra.mxu0 %v319
    %346 = vmatprep.subr.mxu0 0.0
    %347 = vmatpush1.msra.mxu0 %v320
    %348 = vmatprep.subr.mxu0 0.0
    %349 = vmatpush1.msra.mxu0 %v321
    %350 = vmatprep.subr.mxu0 0.0
    %351 = vmatpush1.msra.mxu0 %v322
    %352 = vmatprep.subr.mxu0 0.0
    %353 = vmatpush1.msra.mxu0 %v323
    %354 = vmatprep.subr.mxu0 0.0
    %355 = vmatpush1.msra.mxu0 %v324
    %356 = vmatprep.subr.mxu0 0.0
    %357 = vmatpush1.msra.mxu0 %v325
    %358 = vmatprep.subr.mxu0 0.0
    %359 = vmatpush1.msra.mxu0 %v326
    %360 = vmatprep.subr.mxu0 0.0
    %361 = vmatpush1.msra.mxu0 %v327
    %362 = vmatprep.subr.mxu0 0.0
    %363 = vmatpush1.msra.mxu0 %v328
    %364 = vmatprep.subr.mxu0 0.0
    %365 = vmatpush1.msra.mxu0 %v329
    %366 = vmatprep.subr.mxu0 0.0
    %367 = vmatpush1.msra.mxu0 %v330
    %368 = vmatprep.subr.mxu0 0.0
    %369 = vmatpush1.msra.mxu0 %v331
    %370 = vmatprep.subr.mxu0 0.0
    %371 = vmatpush1.msra.mxu0 %v332
    %372 = vmatprep.subr.mxu0 0.0
    %373 = vmatpush1.msra.mxu0 0.0
    %374 = vmatprep.subr.mxu0 0.0
    %375 = vmatpush1.msra.mxu0 0.0
    %376 = vmatprep.subr.mxu0 0.0
    %377 = vmatpush1.msra.mxu0 0.0
    %378 = vmatprep.subr.mxu0 0.0
    %379 = vmatpush1.msra.mxu0 0.0
    %380 = vmatprep.subr.mxu0 0.0
    %381 = vmatpush1.msra.mxu0 0.0
    %382 = vmatprep.subr.mxu0 0.0
    %383 = vmatpush1.msra.mxu0 0.0
    %384 = vmatprep.subr.mxu0 0.0
    %385 = vmatpush1.msra.mxu0 0.0
    %386 = vmatprep.subr.mxu0 0.0
    %387 = vmatpush1.msra.mxu0 0.0
    %388 = vmatprep.subr.mxu0 0.0
    %389 = vmatpush1.msra.mxu0 0.0
    %390 = vmatprep.subr.mxu0 0.0
    %391 = vmatpush1.msra.mxu0 0.0
    %392 = vmatprep.subr.mxu0 0.0
    %393 = vmatpush1.msra.mxu0 0.0
    %394 = vmatprep.subr.mxu0 0.0
    %395 = vmatpush1.msra.mxu0 0.0
    %396 = vmatprep.subr.mxu0 0.0
    %397 = vmatpush1.msra.mxu0 0.0
    %398 = vmatprep.subr.mxu0 0.0
    %399 = vmatpush1.msra.mxu0 0.0
    %400 = vmatprep.subr.mxu0 0.0
    %401 = vmatpush1.msra.mxu0 0.0
    %402 = vmatprep.subr.mxu0 0.0
    %403 = vmatpush1.msra.mxu0 0.0
    %404 = vmatprep.mubr.f32.mxu0 0.0
    %405 = vmatmul.mubr.f32.gmra.mrb[0].mxu0 %v71
    %v406 = vpop.f32.mrb[0].mxu0
    %v407 = vadd.f32 %v338, %v406
    %v408 = vpop.f32.mrb[0].mxu0
    %409 = vdwg.mxu0
    %v410 = vmul.f32 %v223, %v314
    %v411 = vadd.f32 %v407, %v410
    %v412 = vtanh.pop %v411
    %v413 = vmul.f32 %v218, 0.5
    %v414 = vtanh.pop %v413
    %v415 = vmul.f32 %v414, 0.5
    %v416 = vadd.f32 %v415, 0.5
    %v417 = vsub.f32 %v412, %v72
    %v418 = vmul.f32 %v416, %v417
    %v419 = vadd.f32 %v418, %v72
    %420 = vst [vmem:[#allocation8] sm:$0xff] %v419
    // Predicated region
    $region46: #{gru_cell_forward.1} parent=1 // pred_check
      _
    $region47: #{gru_cell_forward.1} parent=1 // pred_check_branch
      %422 = sbr.rel (0) target = $region49
    $region48: #{gru_cell_forward.1} parent=1 // pred_region
      %s424 = ssub.s32 128, 128
      %425 = vsyncadd [#allocation4], %s424
      %s427 = sshll.u32 [#allocation8], 4
      %s428 = int_to_ptr.vmem [resolvable:$true] %s427
      %430 = dma.vmem_to_hbm [thread:$0]  %s428, 128, %s8, [#allocation4]
    $region49: #{gru_cell_forward.1} parent=1 // pred_fallthru
      _
    // Predicated region
    $region50: #{gru_cell_forward.1} parent=1 // pred_check
      _
    $region51: #{gru_cell_forward.1} parent=1 // pred_check_branch
      %432 = sbr.rel (0) target = $region53
    $region52: #{gru_cell_forward.1} parent=1 // pred_region
      %433 = dma.done [#allocation4], 128
    $region53: #{gru_cell_forward.1} parent=1 // pred_fallthru
      _
    %434 = vsyncpa [#allocation3], 1
    %435 = vsyncpa [#allocation6], 1
    %436 = vsyncpa [#allocation4], 1

</llo_original>
